<compile_context>
chip_gen: v5e
topology: v5e:2x2
jax: 0.10.0
libtpu: 0.0.40
codegen_flags: <defaults>
</compile_context>

<pallas_src>
import functools
import math

import jax
import jax.numpy as jnp
from jax.experimental import pallas as pl
from jax.experimental.pallas import tpu as pltpu

LOG_2PI = math.log(2.0 * math.pi)
PRIOR_SIGMA = 0.1  # TODO(synk): prior sigma is baked in; thread it through if the module is built with a different prior.


def _softplus_thresh(x):
    # F.softplus(x, beta=1, threshold=20): linear above the threshold.
    x = x.astype(jnp.float32)
    return jnp.where(x > 20.0, x, jnp.log(1.0 + jnp.exp(jnp.minimum(x, 20.0))))


def _sum2d(x):
    # Full reduction that stays >=2-D throughout (Mosaic friendly): (r, c) -> (1, 1).
    return jnp.sum(jnp.sum(x, axis=1, keepdims=True), axis=0, keepdims=True)


def _pick_tile(dim, cap, aligns):
    """Largest multiple of one of `aligns` that divides `dim` and is <= cap.

    Falls back to the full dimension (always a legal block)."""
    if dim <= cap:
        return dim
    for align in aligns:
        t = (cap // align) * align
        while t >= align:
            if dim % t == 0:
                return t
            t -= align
    # TODO(synk): pad + mask non-divisible dims instead of a full-dim fallback
    # (a huge full-dim block can exceed the VMEM limit for very large layers).
    return dim


def _device_caps():
    """Generation-aware tile caps / VMEM limits.

    v5e / v6e: 128 MiB VMEM, one TensorCore -> big (1024) weight tiles, 64 MiB
    scoped limit.  v7x (or unknown): 64 MiB VMEM, two TensorCores -> 512-tile
    weight streams and make sure >=2 parallel output blocks exist."""
    vmem_bytes = None
    try:
        vmem_bytes = pltpu.get_tpu_info().vmem_capacity_bytes
    except Exception:
        vmem_bytes = None
    if vmem_bytes is not None and vmem_bytes >= 100 * 1024 * 1024:
        return dict(sample_cap=1024, det_cap=1024,
                    vmem_limit=64 * 1024 * 1024, split_parallel=False)
    return dict(sample_cap=512, det_cap=1024,
                vmem_limit=32 * 1024 * 1024, split_parallel=True)


# ----------------------------------------------------------------------------
# Kernels
# ----------------------------------------------------------------------------
def _matmul_bias_kernel(x_ref, w_ref, b_ref, out_ref, acc_ref):
    """out = X @ W + b, tiled over (m, n, k) with an f32 VMEM accumulator."""
    k = pl.program_id(2)

    @pl.when(k == 0)
    def _():
        acc_ref[...] = jnp.zeros_like(acc_ref)

    acc_ref[...] += jnp.dot(x_ref[...], w_ref[...],
                            preferred_element_type=jnp.float32)

    @pl.when(k == pl.num_programs(2) - 1)
    def _():
        out_ref[...] = (acc_ref[...] + b_ref[...].astype(jnp.float32)
                        ).astype(out_ref.dtype)


def _fused_sample_kernel(x_ref, wmu_ref, wp_ref, epsw_ref, bmu_ref, bp_ref,
                         epsb_ref, out_ref, lqw_ref, sq_ref,
                         acc_ref, lqw_acc, sq_acc):
    """Single-batch-tile path: sample W on the fly, matmul, emit KL partials.

    grid = (n_out tiles, n_in tiles); the second axis is the reduction axis.
    KL partials are accumulated across k in (1,1) VMEM scratch and written
    once per column block at k == last (one lane-dense (1,8,128) store)."""
    k = pl.program_id(1)
    last_k = pl.num_programs(1) - 1

    @pl.when(k == 0)
    def _():
        acc_ref[...] = jnp.zeros_like(acc_ref)
        lqw_acc[...] = jnp.zeros_like(lqw_acc)
        sq_acc[...] = jnp.zeros_like(sq_acc)

    # ---- hot path: sample the weight tile and feed the MXU -----------------
    eps_w = epsw_ref[...].astype(jnp.float32)
    std_w = 1e-6 + _softplus_thresh(wp_ref[...])
    w = wmu_ref[...].astype(jnp.float32) + std_w * eps_w
    acc_ref[...] += jnp.dot(x_ref[...], w, preferred_element_type=jnp.float32)

    # ---- per-tile KL partials, accumulated across k -------------------------
    # lqw = -sum(log std) - 0.5*sum(eps^2)   (constants folded in the wrapper)
    # lpw needs sum(W^2)                      (scale + constants in the wrapper)
    lqw_acc[...] += -_sum2d(jnp.log(std_w)) - 0.5 * _sum2d(eps_w * eps_w)
    sq_acc[...] += _sum2d(w * w)

    # ---- bias + finalize: only on the last reduction step -------------------
    @pl.when(k == last_k)
    def _():
        eps_b = epsb_ref[...].astype(jnp.float32)
        std_b = 1e-6 + _softplus_thresh(bp_ref[...])
        b = bmu_ref[...].astype(jnp.float32) + std_b * eps_b
        out_ref[...] = (acc_ref[...] + b).astype(out_ref.dtype)

        lqw_tot = (lqw_acc[...] - _sum2d(jnp.log(std_b))
                   - 0.5 * _sum2d(eps_b * eps_b))
        sq_tot = sq_acc[...] + _sum2d(b * b)
        lqw_ref[0] = jnp.broadcast_to(lqw_tot, (8, 128))
        sq_ref[0] = jnp.broadcast_to(sq_tot, (8, 128))


def _sample_weights_kernel(wmu_ref, wp_ref, epsw_ref, bmu_ref, bp_ref,
                           epsb_ref, w_ref, b_ref, lqw_ref, sq_ref):
    """Prologue for the multi-batch-tile path: sample W/b once into HBM and
    emit per-tile KL partials, so the following matmul streams a single weight
    array regardless of how many batch tiles it has."""
    a = pl.program_id(1)   # n_in tile index (innermost, sequential)

    eps_w = epsw_ref[...].astype(jnp.float32)
    std_w = 1e-6 + _softplus_thresh(wp_ref[...])
    w = wmu_ref[...].astype(jnp.float32) + std_w * eps_w
    w_ref[...] = w.astype(w_ref.dtype)

    lqw_t = -_sum2d(jnp.log(std_w)) - 0.5 * _sum2d(eps_w * eps_w)
    sq_t = _sum2d(w * w)
    lqw_ref[0] = jnp.broadcast_to(lqw_t, (8, 128))
    sq_ref[0] = jnp.broadcast_to(sq_t, (8, 128))

    # The bias chunk of this column block is sampled / counted exactly once.
    @pl.when(a == 0)
    def _():
        eps_b = epsb_ref[...].astype(jnp.float32)
        std_b = 1e-6 + _softplus_thresh(bp_ref[...])
        bias = bmu_ref[...].astype(jnp.float32) + std_b * eps_b
        b_ref[...] = bias.astype(b_ref.dtype)
        lqw_b = -_sum2d(jnp.log(std_b)) - 0.5 * _sum2d(eps_b * eps_b)
        sq_b = _sum2d(bias * bias)
        lqw_ref[0] = jnp.broadcast_to(lqw_t + lqw_b, (8, 128))
        sq_ref[0] = jnp.broadcast_to(sq_t + sq_b, (8, 128))


# ----------------------------------------------------------------------------
# Wrappers
# ----------------------------------------------------------------------------
def _matmul_bias(X, W, b, *, tile_cap, vmem_limit, split_parallel):
    """Tiled out = X @ W + b (used by the deterministic and the split path)."""
    B, n_in = X.shape
    n_out = W.shape[1]
    tm = _pick_tile(B, 256, (128, 8))
    tn = _pick_tile(n_out, tile_cap, (128,))
    tk = _pick_tile(n_in, tile_cap, (128,))
    if split_parallel and (B // tm) * (n_out // tn) == 1 and tn % 256 == 0:
        tn //= 2   # give the second v7x TensorCore a block to work on
    gm, gn, gk = B // tm, n_out // tn, n_in // tk

    return pl.pallas_call(
        _matmul_bias_kernel,
        out_shape=jax.ShapeDtypeStruct((B, n_out), X.dtype),
        grid_spec=pltpu.PrefetchScalarGridSpec(
            num_scalar_prefetch=0, grid=(gm, gn, gk),
            in_specs=[pl.BlockSpec((tm, tk), lambda i, j, k: (i, k)),
                      pl.BlockSpec((tk, tn), lambda i, j, k: (k, j)),
                      pl.BlockSpec((1, tn), lambda i, j, k: (0, j))],
            out_specs=pl.BlockSpec((tm, tn), lambda i, j, k: (i, j)),
            scratch_shapes=[pltpu.VMEM((tm, tn), jnp.float32)]),
        compiler_params=pltpu.CompilerParams(
            dimension_semantics=("parallel", "parallel", "arbitrary"),
            vmem_limit_bytes=vmem_limit),
        cost_estimate=pl.CostEstimate(
            flops=2 * B * n_in * n_out,
            transcendentals=0,
            bytes_accessed=4 * (B * n_in + n_in * n_out + n_out + B * n_out)),
    )(X, W, b)


@functools.partial(jax.jit, static_argnames=("training", "sample"))
def bayes_linear_forward(X, W_mu, W_p, b_mu, b_p, eps_W, eps_b,
                         *, training=True, sample=False):
    """Mirror of BayesLinear_Normalq.forward.

    b_mu, b_p, eps_b are (1, n_out) rows.  Returns (output, lqw, lpw)."""
    B, n_in = X.shape
    n_out = W_mu.shape[1]
    caps = _device_caps()

    if (not training) and (not sample):
        out = _matmul_bias(X, W_mu, b_mu, tile_cap=caps["det_cap"],
                           vmem_limit=caps["vmem_limit"],
                           split_parallel=caps["split_parallel"])
        return out, jnp.float32(0.0), jnp.float32(0.0)

    tm = _pick_tile(B, 256, (128, 8))
    gm = B // tm

    if gm == 1:
        # Fused path: a single batch tile -> sample W on the fly inside the
        # matmul; each weight stream is read exactly once from HBM.
        tn = _pick_tile(n_out, caps["sample_cap"], (128,))
        tk = _pick_tile(n_in, caps["sample_cap"], (128,))
        if caps["split_parallel"] and n_out // tn == 1 and tn % 256 == 0:
            tn //= 2
        gn, gk = n_out // tn, n_in // tk

        out, lqw_part, sq_part = pl.pallas_call(
            _fused_sample_kernel,
            out_shape=(jax.ShapeDtypeStruct((B, n_out), X.dtype),
                       jax.ShapeDtypeStruct((gn, 8, 128), jnp.float32),
                       jax.ShapeDtypeStruct((gn, 8, 128), jnp.float32)),
            grid_spec=pltpu.PrefetchScalarGridSpec(
                num_scalar_prefetch=0, grid=(gn, gk),
                in_specs=[pl.BlockSpec((B, tk), lambda j, k: (0, k)),
                          pl.BlockSpec((tk, tn), lambda j, k: (k, j)),
                          pl.BlockSpec((tk, tn), lambda j, k: (k, j)),
                          pl.BlockSpec((tk, tn), lambda j, k: (k, j)),
                          pl.BlockSpec((1, tn), lambda j, k: (0, j)),
                          pl.BlockSpec((1, tn), lambda j, k: (0, j)),
                          pl.BlockSpec((1, tn), lambda j, k: (0, j))],
                out_specs=(pl.BlockSpec((B, tn), lambda j, k: (0, j)),
                           pl.BlockSpec((1, 8, 128), lambda j, k: (j, 0, 0)),
                           pl.BlockSpec((1, 8, 128), lambda j, k: (j, 0, 0))),
                scratch_shapes=[pltpu.VMEM((B, tn), jnp.float32),
                                pltpu.VMEM((1, 1), jnp.float32),
                                pltpu.VMEM((1, 1), jnp.float32)]),
            compiler_params=pltpu.CompilerParams(
                dimension_semantics=("parallel", "arbitrary"),
                vmem_limit_bytes=caps["vmem_limit"]),
            cost_estimate=pl.CostEstimate(
                flops=2 * B * n_in * n_out + 8 * n_in * n_out,
                transcendentals=2 * n_in * n_out,
                bytes_accessed=4 * (B * n_in + 3 * n_in * n_out + 3 * n_out
                                    + B * n_out)),
        )(X, W_mu, W_p, eps_W, b_mu, b_p, eps_b)
    else:
        # Split path (gm > 1): sample W/b once into HBM (weights streamed once
        # instead of once per batch tile), then a plain tiled matmul.
        tn = _pick_tile(n_out, caps["sample_cap"], (128,))
        tk = _pick_tile(n_in, caps["sample_cap"], (128,))
        gn, gk = n_out // tn, n_in // tk

        w_s, b_s, lqw_part, sq_part = pl.pallas_call(
            _sample_weights_kernel,
            out_shape=(jax.ShapeDtypeStruct((n_in, n_out), jnp.float32),
                       jax.ShapeDtypeStruct((1, n_out), jnp.float32),
                       jax.ShapeDtypeStruct((gn * gk, 8, 128), jnp.float32),
                       jax.ShapeDtypeStruct((gn * gk, 8, 128), jnp.float32)),
            grid_spec=pltpu.PrefetchScalarGridSpec(
                num_scalar_prefetch=0, grid=(gn, gk),
                in_specs=[pl.BlockSpec((tk, tn), lambda j, a: (a, j)),
                          pl.BlockSpec((tk, tn), lambda j, a: (a, j)),
                          pl.BlockSpec((tk, tn), lambda j, a: (a, j)),
                          pl.BlockSpec((1, tn), lambda j, a: (0, j)),
                          pl.BlockSpec((1, tn), lambda j, a: (0, j)),
                          pl.BlockSpec((1, tn), lambda j, a: (0, j))],
                out_specs=(pl.BlockSpec((tk, tn), lambda j, a: (a, j)),
                           pl.BlockSpec((1, tn), lambda j, a: (0, j)),
                           pl.BlockSpec((1, 8, 128),
                                        lambda j, a: (j * gk + a, 0, 0)),
                           pl.BlockSpec((1, 8, 128),
                                        lambda j, a: (j * gk + a, 0, 0)))),
            compiler_params=pltpu.CompilerParams(
                dimension_semantics=("parallel", "arbitrary"),
                vmem_limit_bytes=caps["vmem_limit"]),
            cost_estimate=pl.CostEstimate(
                flops=8 * n_in * n_out,
                transcendentals=2 * n_in * n_out,
                bytes_accessed=4 * (4 * n_in * n_out + 5 * n_out)),
        )(W_mu, W_p, eps_W, b_mu, b_p, eps_b)

        out = _matmul_bias(X, w_s, b_s, tile_cap=caps["det_cap"],
                           vmem_limit=caps["vmem_limit"],
                           split_parallel=caps["split_parallel"])

    # Fold the compile-time constants of the Gaussian log-likelihoods.
    n_total = n_in * n_out + n_out
    lqw = jnp.sum(lqw_part[:, 0, 0]) + jnp.float32(-0.5 * LOG_2PI * n_total)
    lpw = (jnp.float32(-0.5 / (PRIOR_SIGMA * PRIOR_SIGMA))
           * jnp.sum(sq_part[:, 0, 0])
           + jnp.float32(n_total * (-0.5 * LOG_2PI - math.log(PRIOR_SIGMA))))
    return out, lqw, lpw


# ----------------------------------------------------------------------------
# Reference + self-test
# ----------------------------------------------------------------------------
def _reference_forward(X, W_mu, W_p, b_mu, b_p, eps_W, eps_b):
    """Pure-JAX mirror of the original PyTorch formulation."""
    eps_W = eps_W.astype(jnp.float32)
    eps_b = eps_b.astype(jnp.float32)
    std_w = 1e-6 + _softplus_thresh(W_p)
    std_b = 1e-6 + _softplus_thresh(b_p)
    W = W_mu + std_w * eps_W
    b = b_mu + std_b * eps_b
    out = jnp.dot(X, W, precision=jax.lax.Precision.HIGHEST) + b

    def loglike(x, mu, sigma):
        inner = (x - mu) / sigma
        return jnp.sum(-0.5 * LOG_2PI - jnp.log(sigma) - 0.5 * inner * inner)

    lqw = loglike(W, W_mu, std_w) + loglike(b, b_mu, std_b)
    prior_sig = jnp.float32(PRIOR_SIGMA)
    lpw = loglike(W, 0.0, prior_sig) + loglike(b, 0.0, prior_sig)
    return out, lqw, lpw


if __name__ == "__main__":
    def _run_case(batch, n_in, n_out, seed, check_det=True):
        key = jax.random.PRNGKey(seed)
        k_x, k_wmu, k_wp, k_bmu, k_bp, k_ew, k_eb = jax.random.split(key, 7)

        X = jax.random.normal(k_x, (batch, n_in), dtype=jnp.float32)
        # Parameter init matches the module's __init__ distributions.
        W_mu = jax.random.uniform(k_wmu, (n_in, n_out), jnp.float32, -0.1, 0.1)
        W_p = jax.random.uniform(k_wp, (n_in, n_out), jnp.float32, -3.0, -2.0)
        b_mu = jax.random.uniform(k_bmu, (1, n_out), jnp.float32, -0.1, 0.1)
        b_p = jax.random.uniform(k_bp, (1, n_out), jnp.float32, -3.0, -2.0)
        # eps ~ N(0,1), sampled in glue code; stored/streamed as bf16 to halve
        # one of the three weight-sized HBM streams (upcast inside the kernel).
        eps_W = jax.random.normal(k_ew, (n_in, n_out), dtype=jnp.bfloat16)
        eps_b = jax.random.normal(k_eb, (1, n_out), dtype=jnp.bfloat16)

        out, lqw, lpw = bayes_linear_forward(
            X, W_mu, W_p, b_mu, b_p, eps_W, eps_b, training=True, sample=True)
        jax.block_until_ready((out, lqw, lpw))

        ref_out, ref_lqw, ref_lpw = _reference_forward(
            X, W_mu, W_p, b_mu, b_p, eps_W, eps_b)
        assert jnp.allclose(out, ref_out, atol=2e-2, rtol=1e-2), "sample output mismatch"
        assert jnp.allclose(lqw, ref_lqw, atol=1.0, rtol=5e-4), "lqw mismatch"
        assert jnp.allclose(lpw, ref_lpw, atol=1.0, rtol=5e-4), "lpw mismatch"

        if check_det:
            out_det, z0, z1 = bayes_linear_forward(
                X, W_mu, W_p, b_mu, b_p, eps_W, eps_b,
                training=False, sample=False)
            jax.block_until_ready(out_det)
            ref_det = jnp.dot(X, W_mu,
                              precision=jax.lax.Precision.HIGHEST) + b_mu
            assert jnp.allclose(out_det, ref_det, atol=2e-2, rtol=1e-2), "det output mismatch"
            assert float(z0) == 0.0 and float(z1) == 0.0

    # Small single-tile case (fused sampling path, grid = (1, 1)).
    _run_case(batch=8, n_in=32, n_out=32, seed=0)
    # Multi-tile fused path: exercises the k reduction + per-column KL partials.
    _run_case(batch=8, n_in=2048, n_out=1280, seed=1, check_det=False)
    # Large batch (gm > 1): sample-weights prologue + plain tiled matmul, so
    # the three weight streams are read once instead of once per batch tile.
    _run_case(batch=512, n_in=2048, n_out=512, seed=2)

    print("KERNEL_OK")
</pallas_src>

<mosaic_0001>
module attributes {stable_mosaic.version = 11 : i64} {
  func.func @_fused_sample_kernel(%arg0: i32, %arg1: i32, %arg2: memref<8x32xf32, #tpu.memory_space<vmem>>, %arg3: memref<32x32xf32, #tpu.memory_space<vmem>>, %arg4: memref<32x32xf32, #tpu.memory_space<vmem>>, %arg5: memref<32x32xbf16, #tpu.memory_space<vmem>>, %arg6: memref<1x32xf32, #tpu.memory_space<vmem>>, %arg7: memref<1x32xf32, #tpu.memory_space<vmem>>, %arg8: memref<1x32xbf16, #tpu.memory_space<vmem>>, %arg9: memref<8x32xf32, #tpu.memory_space<vmem>>, %arg10: memref<1x8x128xf32, #tpu.memory_space<vmem>>, %arg11: memref<1x8x128xf32, #tpu.memory_space<vmem>>, %arg12: memref<8x32xf32, #tpu.memory_space<vmem>>, %arg13: memref<1x1xf32, #tpu.memory_space<vmem>>, %arg14: memref<1x1xf32, #tpu.memory_space<vmem>>) attributes {dimension_semantics = [#tpu.dimension_semantics<parallel>, #tpu.dimension_semantics<arbitrary>], iteration_bounds = array<i64: 1, 1>, scalar_prefetch = 0 : i64, scratch_operands = 3 : i64, tpu.core_type = #tpu.core_type<tc>, window_params = [{transform_indices = @transform_0, window_bounds = array<i64: 8, 32>}, {transform_indices = @transform_1, window_bounds = array<i64: 32, 32>}, {transform_indices = @transform_2, window_bounds = array<i64: 32, 32>}, {transform_indices = @transform_3, window_bounds = array<i64: 32, 32>}, {transform_indices = @transform_4, window_bounds = array<i64: 1, 32>}, {transform_indices = @transform_5, window_bounds = array<i64: 1, 32>}, {transform_indices = @transform_6, window_bounds = array<i64: 1, 32>}, {transform_indices = @transform_7, window_bounds = array<i64: 8, 32>}, {transform_indices = @transform_8, window_bounds = array<i64: 1, 8, 128>}, {transform_indices = @transform_9, window_bounds = array<i64: 1, 8, 128>}]} {
    %c0_i32 = arith.constant 0 : i32
    %0 = arith.cmpi eq, %arg1, %c0_i32 : i32
    %1 = arith.extui %0 : i1 to i32
    %c0_i32_0 = arith.constant 0 : i32
    %2 = arith.cmpi ne, %1, %c0_i32_0 : i32
    scf.if %2 {
      %cst_34 = arith.constant 0.000000e+00 : f32
      %54 = vector.broadcast %cst_34 : f32 to vector<8x32xf32>
      %c0_35 = arith.constant 0 : index
      %c0_36 = arith.constant 0 : index
      %55 = vector.load %arg12[%c0_35, %c0_36] : memref<8x32xf32, #tpu.memory_space<vmem>>, vector<8x32xf32>
      tpu.vector_store %arg12[%c0_35, %c0_36], %54 {strides = array<i32>} : memref<8x32xf32, #tpu.memory_space<vmem>>, vector<8x32xf32>,
      %cst_37 = arith.constant 0.000000e+00 : f32
      %56 = vector.broadcast %cst_37 : f32 to vector<1x1xf32>
      %c0_38 = arith.constant 0 : index
      %c0_39 = arith.constant 0 : index
      %57 = vector.load %arg13[%c0_38, %c0_39] : memref<1x1xf32, #tpu.memory_space<vmem>>, vector<1x1xf32>
      tpu.vector_store %arg13[%c0_38, %c0_39], %56 {strides = array<i32>} : memref<1x1xf32, #tpu.memory_space<vmem>>, vector<1x1xf32>,
      %cst_40 = arith.constant 0.000000e+00 : f32
      %58 = vector.broadcast %cst_40 : f32 to vector<1x1xf32>
      %c0_41 = arith.constant 0 : index
      %c0_42 = arith.constant 0 : index
      %59 = vector.load %arg14[%c0_41, %c0_42] : memref<1x1xf32, #tpu.memory_space<vmem>>, vector<1x1xf32>
      tpu.vector_store %arg14[%c0_41, %c0_42], %58 {strides = array<i32>} : memref<1x1xf32, #tpu.memory_space<vmem>>, vector<1x1xf32>,
    } else {
    }
    %c0 = arith.constant 0 : index
    %c0_1 = arith.constant 0 : index
    %3 = vector.load %arg5[%c0, %c0_1] : memref<32x32xbf16, #tpu.memory_space<vmem>>, vector<32x32xbf16>
    %4 = arith.extf %3 : vector<32x32xbf16> to vector<32x32xf32>
    %c0_2 = arith.constant 0 : index
    %c0_3 = arith.constant 0 : index
    %5 = vector.load %arg4[%c0_2, %c0_3] : memref<32x32xf32, #tpu.memory_space<vmem>>, vector<32x32xf32>
    %cst = arith.constant 2.000000e+01 : f32
    %6 = vector.broadcast %cst : f32 to vector<32x32xf32>
    %7 = arith.cmpf ogt, %5, %6 : vector<32x32xf32>
    %cst_4 = arith.constant 2.000000e+01 : f32
    %8 = vector.broadcast %cst_4 : f32 to vector<32x32xf32>
    %9 = arith.minimumf %5, %8 : vector<32x32xf32>
    %10 = math.exp %9 : vector<32x32xf32>
    %cst_5 = arith.constant 1.000000e+00 : f32
    %11 = vector.broadcast %cst_5 : f32 to vector<32x32xf32>
    %12 = arith.addf %11, %10 : vector<32x32xf32>
    %13 = math.log %12 : vector<32x32xf32>
    %14 = arith.select %7, %5, %13 : vector<32x32xi1>, vector<32x32xf32>
    %cst_6 = arith.constant 9.99999997E-7 : f32
    %15 = vector.broadcast %cst_6 : f32 to vector<32x32xf32>
    %16 = arith.addf %15, %14 : vector<32x32xf32>
    %c0_7 = arith.constant 0 : index
    %c0_8 = arith.constant 0 : index
    %17 = vector.load %arg3[%c0_7, %c0_8] : memref<32x32xf32, #tpu.memory_space<vmem>>, vector<32x32xf32>
    %18 = arith.mulf %16, %4 : vector<32x32xf32>
    %19 = arith.addf %17, %18 : vector<32x32xf32>
    %c0_9 = arith.constant 0 : index
    %c0_10 = arith.constant 0 : index
    %20 = vector.load %arg12[%c0_9, %c0_10] : memref<8x32xf32, #tpu.memory_space<vmem>>, vector<8x32xf32>
    %c0_11 = arith.constant 0 : index
    %c0_12 = arith.constant 0 : index
    %21 = vector.load %arg2[%c0_11, %c0_12] : memref<8x32xf32, #tpu.memory_space<vmem>>, vector<8x32xf32>
    %cst_13 = arith.constant dense<0.000000e+00> : vector<8x32xf32>
    %22 = tpu.matmul %21, %19, %cst_13 {dimension_numbers = #tpu.dot_dimension_numbers<[1], [0], [0], [1], [0, 0, 1, 1], [], []>} : vector<8x32xf32>, vector<32x32xf32>, vector<8x32xf32> -> vector<8x32xf32>
    %23 = arith.addf %20, %22 : vector<8x32xf32>
    %c0_14 = arith.constant 0 : index
    %c0_15 = arith.constant 0 : index
    %24 = vector.load %arg12[%c0_14, %c0_15] : memref<8x32xf32, #tpu.memory_space<vmem>>, vector<8x32xf32>
    tpu.vector_store %arg12[%c0_14, %c0_15], %23 {strides = array<i32>} : memref<8x32xf32, #tpu.memory_space<vmem>>, vector<8x32xf32>,
    %c0_16 = arith.constant 0 : index
    %c0_17 = arith.constant 0 : index
    %25 = vector.load %arg13[%c0_16, %c0_17] : memref<1x1xf32, #tpu.memory_space<vmem>>, vector<1x1xf32>
    %26 = math.log %16 : vector<32x32xf32>
    %cst_18 = arith.constant dense<0.000000e+00> : vector<32xf32>
    %27 = vector.multi_reduction <add>, %26, %cst_18 [1] : vector<32x32xf32> to vector<32xf32>
    %28 = vector.shape_cast %27 : vector<32xf32> to vector<32x1xf32>
    %cst_19 = arith.constant dense<0.000000e+00> : vector<1xf32>
    %29 = vector.multi_reduction <add>, %28, %cst_19 [0] : vector<32x1xf32> to vector<1xf32>
    %30 = vector.shape_cast %29 : vector<1xf32> to vector<1x1xf32>
    %cst_20 = arith.constant 0.000000e+00 : f32
    %31 = vector.broadcast %cst_20 : f32 to vector<1x1xf32>
    %32 = arith.subf %31, %30 : vector<1x1xf32>
    %33 = arith.mulf %4, %4 : vector<32x32xf32>
    %cst_21 = arith.constant dense<0.000000e+00> : vector<32xf32>
    %34 = vector.multi_reduction <add>, %33, %cst_21 [1] : vector<32x32xf32> to vector<32xf32>
    %35 = vector.shape_cast %34 : vector<32xf32> to vector<32x1xf32>
    %cst_22 = arith.constant dense<0.000000e+00> : vector<1xf32>
    %36 = vector.multi_reduction <add>, %35, %cst_22 [0] : vector<32x1xf32> to vector<1xf32>
    %37 = vector.shape_cast %36 : vector<1xf32> to vector<1x1xf32>
    %cst_23 = arith.constant 5.000000e-01 : f32
    %38 = vector.broadcast %cst_23 : f32 to vector<1x1xf32>
    %39 = arith.mulf %38, %37 : vector<1x1xf32>
    %40 = arith.subf %32, %39 : vector<1x1xf32>
    %41 = arith.addf %25, %40 : vector<1x1xf32>
    %c0_24 = arith.constant 0 : index
    %c0_25 = arith.constant 0 : index
    %42 = vector.load %arg13[%c0_24, %c0_25] : memref<1x1xf32, #tpu.memory_space<vmem>>, vector<1x1xf32>
    tpu.vector_store %arg13[%c0_24, %c0_25], %41 {strides = array<i32>} : memref<1x1xf32, #tpu.memory_space<vmem>>, vector<1x1xf32>,
    %c0_26 = arith.constant 0 : index
    %c0_27 = arith.constant 0 : index
    %43 = vector.load %arg14[%c0_26, %c0_27] : memref<1x1xf32, #tpu.memory_space<vmem>>, vector<1x1xf32>
    %44 = arith.mulf %19, %19 : vector<32x32xf32>
    %cst_28 = arith.constant dense<0.000000e+00> : vector<32xf32>
    %45 = vector.multi_reduction <add>, %44, %cst_28 [1] : vector<32x32xf32> to vector<32xf32>
    %46 = vector.shape_cast %45 : vector<32xf32> to vector<32x1xf32>
    %cst_29 = arith.constant dense<0.000000e+00> : vector<1xf32>
    %47 = vector.multi_reduction <add>, %46, %cst_29 [0] : vector<32x1xf32> to vector<1xf32>
    %48 = vector.shape_cast %47 : vector<1xf32> to vector<1x1xf32>
    %49 = arith.addf %43, %48 : vector<1x1xf32>
    %c0_30 = arith.constant 0 : index
    %c0_31 = arith.constant 0 : index
    %50 = vector.load %arg14[%c0_30, %c0_31] : memref<1x1xf32, #tpu.memory_space<vmem>>, vector<1x1xf32>
    tpu.vector_store %arg14[%c0_30, %c0_31], %49 {strides = array<i32>} : memref<1x1xf32, #tpu.memory_space<vmem>>, vector<1x1xf32>,
    %c0_i32_32 = arith.constant 0 : i32
    %51 = arith.cmpi eq, %arg1, %c0_i32_32 : i32
    %52 = arith.extui %51 : i1 to i32
    %c0_i32_33 = arith.constant 0 : i32
    %53 = arith.cmpi ne, %52, %c0_i32_33 : i32
    scf.if %53 {
      %c0_34 = arith.constant 0 : index
      %c0_35 = arith.constant 0 : index
      %54 = vector.load %arg8[%c0_34, %c0_35] : memref<1x32xbf16, #tpu.memory_space<vmem>>, vector<1x32xbf16>
      %55 = arith.extf %54 : vector<1x32xbf16> to vector<1x32xf32>
      %c0_36 = arith.constant 0 : index
      %c0_37 = arith.constant 0 : index
      %56 = vector.load %arg7[%c0_36, %c0_37] : memref<1x32xf32, #tpu.memory_space<vmem>>, vector<1x32xf32>
      %cst_38 = arith.constant 2.000000e+01 : f32
      %57 = vector.broadcast %cst_38 : f32 to vector<1x32xf32>
      %58 = arith.cmpf ogt, %56, %57 : vector<1x32xf32>
      %cst_39 = arith.constant 2.000000e+01 : f32
      %59 = vector.broadcast %cst_39 : f32 to vector<1x32xf32>
      %60 = arith.minimumf %56, %59 : vector<1x32xf32>
      %61 = math.exp %60 : vector<1x32xf32>
      %cst_40 = arith.constant 1.000000e+00 : f32
      %62 = vector.broadcast %cst_40 : f32 to vector<1x32xf32>
      %63 = arith.addf %62, %61 : vector<1x32xf32>
      %64 = math.log %63 : vector<1x32xf32>
      %65 = arith.select %58, %56, %64 : vector<1x32xi1>, vector<1x32xf32>
      %cst_41 = arith.constant 9.99999997E-7 : f32
      %66 = vector.broadcast %cst_41 : f32 to vector<1x32xf32>
      %67 = arith.addf %66, %65 : vector<1x32xf32>
      %c0_42 = arith.constant 0 : index
      %c0_43 = arith.constant 0 : index
      %68 = vector.load %arg6[%c0_42, %c0_43] : memref<1x32xf32, #tpu.memory_space<vmem>>, vector<1x32xf32>
      %69 = arith.mulf %67, %55 : vector<1x32xf32>
      %70 = arith.addf %68, %69 : vector<1x32xf32>
      %c0_44 = arith.constant 0 : index
      %c0_45 = arith.constant 0 : index
      %71 = vector.load %arg12[%c0_44, %c0_45] : memref<8x32xf32, #tpu.memory_space<vmem>>, vector<8x32xf32>
      %72 = vector.broadcast %70 : vector<1x32xf32> to vector<8x32xf32>
      %73 = arith.addf %71, %72 : vector<8x32xf32>
      %c0_46 = arith.constant 0 : index
      %c0_47 = arith.constant 0 : index
      %74 = vector.load %arg9[%c0_46, %c0_47] : memref<8x32xf32, #tpu.memory_space<vmem>>, vector<8x32xf32>
      tpu.vector_store %arg9[%c0_46, %c0_47], %73 {strides = array<i32>} : memref<8x32xf32, #tpu.memory_space<vmem>>, vector<8x32xf32>,
      %c0_48 = arith.constant 0 : index
      %c0_49 = arith.constant 0 : index
      %75 = vector.load %arg13[%c0_48, %c0_49] : memref<1x1xf32, #tpu.memory_space<vmem>>, vector<1x1xf32>
      %76 = math.log %67 : vector<1x32xf32>
      %cst_50 = arith.constant dense<0.000000e+00> : vector<1xf32>
      %77 = vector.multi_reduction <add>, %76, %cst_50 [1] : vector<1x32xf32> to vector<1xf32>
      %78 = vector.shape_cast %77 : vector<1xf32> to vector<1x1xf32>
      %cst_51 = arith.constant dense<0.000000e+00> : vector<1xf32>
      %79 = vector.multi_reduction <add>, %78, %cst_51 [0] : vector<1x1xf32> to vector<1xf32>
      %80 = vector.shape_cast %79 : vector<1xf32> to vector<1x1xf32>
      %81 = arith.subf %75, %80 : vector<1x1xf32>
      %82 = arith.mulf %55, %55 : vector<1x32xf32>
      %cst_52 = arith.constant dense<0.000000e+00> : vector<1xf32>
      %83 = vector.multi_reduction <add>, %82, %cst_52 [1] : vector<1x32xf32> to vector<1xf32>
      %84 = vector.shape_cast %83 : vector<1xf32> to vector<1x1xf32>
      %cst_53 = arith.constant dense<0.000000e+00> : vector<1xf32>
      %85 = vector.multi_reduction <add>, %84, %cst_53 [0] : vector<1x1xf32> to vector<1xf32>
      %86 = vector.shape_cast %85 : vector<1xf32> to vector<1x1xf32>
      %cst_54 = arith.constant 5.000000e-01 : f32
      %87 = vector.broadcast %cst_54 : f32 to vector<1x1xf32>
      %88 = arith.mulf %87, %86 : vector<1x1xf32>
      %89 = arith.subf %81, %88 : vector<1x1xf32>
      %c0_55 = arith.constant 0 : index
      %c0_56 = arith.constant 0 : index
      %90 = vector.load %arg14[%c0_55, %c0_56] : memref<1x1xf32, #tpu.memory_space<vmem>>, vector<1x1xf32>
      %91 = arith.mulf %70, %70 : vector<1x32xf32>
      %cst_57 = arith.constant dense<0.000000e+00> : vector<1xf32>
      %92 = vector.multi_reduction <add>, %91, %cst_57 [1] : vector<1x32xf32> to vector<1xf32>
      %93 = vector.shape_cast %92 : vector<1xf32> to vector<1x1xf32>
      %cst_58 = arith.constant dense<0.000000e+00> : vector<1xf32>
      %94 = vector.multi_reduction <add>, %93, %cst_58 [0] : vector<1x1xf32> to vector<1xf32>
      %95 = vector.shape_cast %94 : vector<1xf32> to vector<1x1xf32>
      %96 = arith.addf %90, %95 : vector<1x1xf32>
      %97 = vector.shape_cast %89 : vector<1x1xf32> to vector<1x1xf32>
      %98 = vector.broadcast %97 : vector<1x1xf32> to vector<8x128xf32>
      %c0_59 = arith.constant 0 : index
      %c0_60 = arith.constant 0 : index
      %c0_61 = arith.constant 0 : index
      %99 = vector.load %arg10[%c0_59, %c0_60, %c0_61] : memref<1x8x128xf32, #tpu.memory_space<vmem>>, vector<1x8x128xf32>
      %100 = vector.shape_cast %99 : vector<1x8x128xf32> to vector<8x128xf32>
      %101 = vector.shape_cast %98 : vector<8x128xf32> to vector<1x8x128xf32>
      tpu.vector_store %arg10[%c0_59, %c0_60, %c0_61], %101 {strides = array<i32>} : memref<1x8x128xf32, #tpu.memory_space<vmem>>, vector<1x8x128xf32>,
      %102 = vector.shape_cast %96 : vector<1x1xf32> to vector<1x1xf32>
      %103 = vector.broadcast %102 : vector<1x1xf32> to vector<8x128xf32>
      %c0_62 = arith.constant 0 : index
      %c0_63 = arith.constant 0 : index
      %c0_64 = arith.constant 0 : index
      %104 = vector.load %arg11[%c0_62, %c0_63, %c0_64] : memref<1x8x128xf32, #tpu.memory_space<vmem>>, vector<1x8x128xf32>
      %105 = vector.shape_cast %104 : vector<1x8x128xf32> to vector<8x128xf32>
      %106 = vector.shape_cast %103 : vector<8x128xf32> to vector<1x8x128xf32>
      tpu.vector_store %arg11[%c0_62, %c0_63, %c0_64], %106 {strides = array<i32>} : memref<1x8x128xf32, #tpu.memory_space<vmem>>, vector<1x8x128xf32>,
    } else {
    }
    return
  }
  func.func @transform_0(%arg0: i32, %arg1: i32) -> (i32, i32) {
    %c0_i32 = arith.constant 0 : i32
    %c0_i32_0 = arith.constant 0 : i32
    return %c0_i32, %arg1 : i32, i32
  }
  func.func @transform_1(%arg0: i32, %arg1: i32) -> (i32, i32) {
    %c0_i32 = arith.constant 0 : i32
    return %arg1, %arg0 : i32, i32
  }
  func.func @transform_2(%arg0: i32, %arg1: i32) -> (i32, i32) {
    %c0_i32 = arith.constant 0 : i32
    return %arg1, %arg0 : i32, i32
  }
  func.func @transform_3(%arg0: i32, %arg1: i32) -> (i32, i32) {
    %c0_i32 = arith.constant 0 : i32
    return %arg1, %arg0 : i32, i32
  }
  func.func @transform_4(%arg0: i32, %arg1: i32) -> (i32, i32) {
    %c0_i32 = arith.constant 0 : i32
    %c0_i32_0 = arith.constant 0 : i32
    return %c0_i32, %arg0 : i32, i32
  }
  func.func @transform_5(%arg0: i32, %arg1: i32) -> (i32, i32) {
    %c0_i32 = arith.constant 0 : i32
    %c0_i32_0 = arith.constant 0 : i32
    return %c0_i32, %arg0 : i32, i32
  }
  func.func @transform_6(%arg0: i32, %arg1: i32) -> (i32, i32) {
    %c0_i32 = arith.constant 0 : i32
    %c0_i32_0 = arith.constant 0 : i32
    return %c0_i32, %arg0 : i32, i32
  }
  func.func @transform_7(%arg0: i32, %arg1: i32) -> (i32, i32) {
    %c0_i32 = arith.constant 0 : i32
    %c0_i32_0 = arith.constant 0 : i32
    return %c0_i32, %arg0 : i32, i32
  }
  func.func @transform_8(%arg0: i32, %arg1: i32) -> (i32, i32, i32) {
    %c0_i32 = arith.constant 0 : i32
    %c0_i32_0 = arith.constant 0 : i32
    %c0_i32_1 = arith.constant 0 : i32
    return %arg0, %c0_i32, %c0_i32_0 : i32, i32, i32
  }
  func.func @transform_9(%arg0: i32, %arg1: i32) -> (i32, i32, i32) {
    %c0_i32 = arith.constant 0 : i32
    %c0_i32_0 = arith.constant 0 : i32
    %c0_i32_1 = arith.constant 0 : i32
    return %arg0, %c0_i32, %c0_i32_0 : i32, i32, i32
  }
}

</mosaic_0001>

<llo_original>
// kernel: bayes_linear_forward.1
$region0: #{bayes_linear_forward.1}
  #allocation0 [shape = 'u32[]', space=smem, size = 0x4, offset = 0x4, fixed_abs, tag = 'smem constant byte address 0x4 - core index']
  #allocation1 [shape = 'u32[72,128]{1,0:T(1,128)}', space=vmem, size = 0x9000, scoped, tag = 'internal scratch']
  #allocation2 [shape = 'f32[8,32]{1,0:T(8,128)}', space=vmem, size = 0x1000, scoped, tag = 'scratch operand']
  #allocation3 [shape = 'f32[1,1]{1,0:T(1,128)}', space=vmem, size = 0x200, scoped, tag = 'scratch operand']
  #allocation4 [shape = 'f32[1,1]{1,0:T(1,128)}', space=vmem, size = 0x200, scoped, tag = 'scratch operand']
  %s0 = inlined_call_operand.hbm [shape: f32[8,32], index: 0, kind: input, shape index: {}]
  %s1 = inlined_call_operand.hbm [shape: f32[32,32], index: 1, kind: input, shape index: {}]
  %s2 = inlined_call_operand.hbm [shape: f32[32,32], index: 2, kind: input, shape index: {}]
  %s3 = inlined_call_operand.hbm [shape: bf16[32,32], index: 3, kind: input, shape index: {}]
  %s4 = inlined_call_operand.vmem [shape: f32[1,32], index: 4, kind: input, shape index: {}]
  %s5 = inlined_call_operand.vmem [shape: f32[1,32], index: 5, kind: input, shape index: {}]
  %s6 = inlined_call_operand.vmem [shape: bf16[1,32], index: 6, kind: input, shape index: {}]
  %s7 = inlined_call_operand.hbm [shape: f32[8,32], index: 7, kind: output, shape index: {0}]
  %s8 = inlined_call_operand.vmem [shape: f32[1,8,128], index: 8, kind: output, shape index: {1}]
  %s9 = inlined_call_operand.vmem [shape: f32[1,8,128], index: 9, kind: output, shape index: {2}]
  %10 = xla_tuple %s7, %s8, %s9
  %s11 = sld [smem:[#allocation0]]
  $region78: #{bayes_linear_forward.1} parent=0
    _
  %s13 = ssub.s32 1, %s11
  %s14 = scalar_select 0, %s13, %s11
  $region1: #{bayes_linear_forward.1} parent=0
    #allocation5 [shape = 'u8[4096]{0}', space=vmem, size = 0x1000, scoped, tag = 'input window, operand 0, single buffered']
    #allocation6 [shape = 's32[1]{0}', space=sflag, size = 0x4, scoped, tag = 'scoped memory for bayes_linear_forward.1']
    #allocation7 [shape = 's32[1]{0}', space=sflag, size = 0x4, scoped, tag = 'scoped memory for bayes_linear_forward.1']
    #allocation8 [shape = 'u8[16384]{0}', space=vmem, size = 0x4000, scoped, tag = 'input window, operand 1, single buffered']
    #allocation9 [shape = 's32[1]{0}', space=sflag, size = 0x4, scoped, tag = 'scoped memory for bayes_linear_forward.1']
    #allocation10 [shape = 'u8[16384]{0}', space=vmem, size = 0x4000, scoped, tag = 'input window, operand 2, single buffered']
    #allocation11 [shape = 'u8[8192]{0}', space=vmem, size = 0x2000, scoped, tag = 'input window, operand 3, single buffered']
    #allocation12 [shape = 's32[1]{0}', space=sflag, size = 0x4, scoped, tag = 'scoped memory for bayes_linear_forward.1']
    #allocation13 [shape = 'u8[4096]{0}', space=vmem, size = 0x1000, scoped, tag = 'output window, operand 0, single buffered']
    %15 = vsyncpa [#allocation6], 0
    %16 = vsyncpa [#allocation9], 0
    %17 = vsyncpa [#allocation12], 0
    %18 = vsyncpa [#allocation7], 0
    // Predicated region
    $region2: #{bayes_linear_forward.1} parent=1 // pred_check
      _
    $region3: #{bayes_linear_forward.1} parent=1 // pred_check_branch
      %20 = sbr.rel (0) target = $region5
    $region4: #{bayes_linear_forward.1} parent=1 // pred_region
      %22 = vsyncadd [#allocation6], 0
      %s24 = sshll.u32 %s0, 4
      %s25 = int_to_ptr.hbm [resolvable:$true] %s24
      %s26 = sshll.u32 [#allocation5], 4
      %s27 = int_to_ptr.vmem [resolvable:$true] %s26
      %29 = dma.hbm_to_vmem [thread:$0]  %s25, 128, %s27, [#allocation6]
    $region5: #{bayes_linear_forward.1} parent=1 // pred_fallthru
      _
    // Predicated region
    $region6: #{bayes_linear_forward.1} parent=1 // pred_check
      _
    $region7: #{bayes_linear_forward.1} parent=1 // pred_check_branch
      %31 = sbr.rel (0) target = $region9
    $region8: #{bayes_linear_forward.1} parent=1 // pred_region
      %33 = vsyncadd [#allocation9], 0
      %s34 = sshll.u32 %s1, 4
      %s35 = int_to_ptr.hbm [resolvable:$true] %s34
      %s36 = sshll.u32 [#allocation8], 4
      %s37 = int_to_ptr.vmem [resolvable:$true] %s36
      %42 = dma.hbm_to_vmem [thread:$0]  %s35, 512, %s37, [#allocation9], 128, 128, 8
    $region9: #{bayes_linear_forward.1} parent=1 // pred_fallthru
      _
    // Predicated region
    $region10: #{bayes_linear_forward.1} parent=1 // pred_check
      _
    $region11: #{bayes_linear_forward.1} parent=1 // pred_check_branch
      %44 = sbr.rel (0) target = $region13
    $region12: #{bayes_linear_forward.1} parent=1 // pred_region
      %46 = vsyncadd [#allocation9], 0
      %s47 = sshll.u32 %s2, 4
      %s48 = int_to_ptr.hbm [resolvable:$true] %s47
      %s49 = sshll.u32 [#allocation10], 4
      %s50 = int_to_ptr.vmem [resolvable:$true] %s49
      %55 = dma.hbm_to_vmem [thread:$0]  %s48, 512, %s50, [#allocation9], 128, 128, 8
    $region13: #{bayes_linear_forward.1} parent=1 // pred_fallthru
      _
    // Predicated region
    $region14: #{bayes_linear_forward.1} parent=1 // pred_check
      _
    $region15: #{bayes_linear_forward.1} parent=1 // pred_check_branch
      %57 = sbr.rel (0) target = $region17
    $region16: #{bayes_linear_forward.1} parent=1 // pred_region
      %59 = vsyncadd [#allocation12], 0
      %s60 = sshll.u32 %s3, 4
      %s61 = int_to_ptr.hbm [resolvable:$true] %s60
      %s62 = sshll.u32 [#allocation11], 4
      %s63 = int_to_ptr.vmem [resolvable:$true] %s62
      %68 = dma.hbm_to_vmem [thread:$0]  %s61, 256, %s63, [#allocation12], 64, 64, 4
    $region17: #{bayes_linear_forward.1} parent=1 // pred_fallthru
      _
    // Predicated region
    $region18: #{bayes_linear_forward.1} parent=1 // pred_check
      _
    $region19: #{bayes_linear_forward.1} parent=1 // pred_check_branch
      %70 = sbr.rel (0) target = $region21
    $region20: #{bayes_linear_forward.1} parent=1 // pred_region
      _
    $region21: #{bayes_linear_forward.1} parent=1 // pred_fallthru
      _
    // Predicated region
    $region22: #{bayes_linear_forward.1} parent=1 // pred_check
      _
    $region23: #{bayes_linear_forward.1} parent=1 // pred_check_branch
      %72 = sbr.rel (0) target = $region25
    $region24: #{bayes_linear_forward.1} parent=1 // pred_region
      _
    $region25: #{bayes_linear_forward.1} parent=1 // pred_fallthru
      _
    // Predicated region
    $region26: #{bayes_linear_forward.1} parent=1 // pred_check
      _
    $region27: #{bayes_linear_forward.1} parent=1 // pred_check_branch
      %74 = sbr.rel (0) target = $region29
    $region28: #{bayes_linear_forward.1} parent=1 // pred_region
      _
    $region29: #{bayes_linear_forward.1} parent=1 // pred_fallthru
      _
    // Predicated region
    $region30: #{bayes_linear_forward.1} parent=1 // pred_check
      _
    $region31: #{bayes_linear_forward.1} parent=1 // pred_check_branch
      %76 = sbr.rel (0) target = $region33
    $region32: #{bayes_linear_forward.1} parent=1 // pred_region
      %78 = dma.done [#allocation6], 128
    $region33: #{bayes_linear_forward.1} parent=1 // pred_fallthru
      _
    // Predicated region
    $region34: #{bayes_linear_forward.1} parent=1 // pred_check
      _
    $region35: #{bayes_linear_forward.1} parent=1 // pred_check_branch
      %80 = sbr.rel (0) target = $region37
    $region36: #{bayes_linear_forward.1} parent=1 // pred_region
      %82 = dma.done [#allocation9], 512
    $region37: #{bayes_linear_forward.1} parent=1 // pred_fallthru
      _
    // Predicated region
    $region38: #{bayes_linear_forward.1} parent=1 // pred_check
      _
    $region39: #{bayes_linear_forward.1} parent=1 // pred_check_branch
      %84 = sbr.rel (0) target = $region41
    $region40: #{bayes_linear_forward.1} parent=1 // pred_region
      %86 = dma.done [#allocation9], 512
    $region41: #{bayes_linear_forward.1} parent=1 // pred_fallthru
      _
    // Predicated region
    $region42: #{bayes_linear_forward.1} parent=1 // pred_check
      _
    $region43: #{bayes_linear_forward.1} parent=1 // pred_check_branch
      %88 = sbr.rel (0) target = $region45
    $region44: #{bayes_linear_forward.1} parent=1 // pred_region
      %90 = dma.done [#allocation12], 256
    $region45: #{bayes_linear_forward.1} parent=1 // pred_fallthru
      _
    %p91 = scmp.eq.s32.totalorder 0, 0
    // Predicated region
    $region46: #{bayes_linear_forward.1} parent=1 // pred_check
      %p92 = pneg %p91
    $region47: #{bayes_linear_forward.1} parent=1 // pred_check_branch
      %94 = sbr.rel (%p92) target = $region49
    $region48: #{bayes_linear_forward.1} parent=1 // pred_region
      %vm95 = vcmask 261120
      %96 = vst.msk [vmem:[#allocation2] sm:$0xff] %vm95, 0.0
      %vm97 = vcmask 0
      %98 = vst.msk [vmem:[#allocation3] sm:$0x1] %vm97, 0.0
      %99 = vst.msk [vmem:[#allocation4] sm:$0x1] %vm97, 0.0
    $region49: #{bayes_linear_forward.1} parent=1 // pred_fallthru
      _
    %v100 = vld [vmem:[#allocation11] sm:$0xf]
    %v101 = vld [vmem:[#allocation11 + $0x4] sm:$0xf]
    %v102 = vld [vmem:[#allocation11 + $0x8] sm:$0xf]
    %v103 = vld [vmem:[#allocation11 + $0xc] sm:$0xf]
    %v104 = vunpack.c.l.bf16 %v100
    %v105 = vunpack.c.l.bf16 %v101
    %v106 = vunpack.c.l.bf16 %v102
    %v107 = vunpack.c.l.bf16 %v103
    %v108 = vld [vmem:[#allocation10] sm:$0xff]
    %v109 = vld [vmem:[#allocation10 + $0x8] sm:$0xff]
    %v110 = vld [vmem:[#allocation10 + $0x10] sm:$0xff]
    %v111 = vld [vmem:[#allocation10 + $0x18] sm:$0xff]
    %vm112 = vcmp.gt.f32.partialorder %v108, 20.0
    %vm113 = vcmp.gt.f32.partialorder %v109, 20.0
    %vm114 = vcmp.gt.f32.partialorder %v110, 20.0
    %vm115 = vcmp.gt.f32.partialorder %v111, 20.0
    %v116 = vmin.f32 %v108, 20.0
    %v117 = vmin.f32 %v109, 20.0
    %v118 = vmin.f32 %v110, 20.0
    %v119 = vmin.f32 %v111, 20.0
    %v120 = vmul.f32 %v116, 1.442695
    %v121 = vpow.pop %v120
    %v122 = vmul.f32 %v117, 1.442695
    %v123 = vpow.pop %v122
    %v124 = vmul.f32 %v118, 1.442695
    %v125 = vpow.pop %v124
    %v126 = vmul.f32 %v119, 1.442695
    %v127 = vpow.pop %v126
    %v128 = vadd.f32 %v121, 1.0
    %v129 = vadd.f32 %v123, 1.0
    %v130 = vadd.f32 %v125, 1.0
    %v131 = vadd.f32 %v127, 1.0
    %v132 = vlog2.pop %v128
    %v133 = vmul.f32 %v132, 0.6931472
    %v134 = vlog2.pop %v129
    %v135 = vmul.f32 %v134, 0.6931472
    %v136 = vlog2.pop %v130
    %v137 = vmul.f32 %v136, 0.6931472
    %v138 = vlog2.pop %v131
    %v139 = vmul.f32 %v138, 0.6931472
    %v140 = vsel %vm112, %v108, %v133
    %v141 = vsel %vm113, %v109, %v135
    %v142 = vsel %vm114, %v110, %v137
    %v143 = vsel %vm115, %v111, %v139
    %v144 = vadd.f32 %v140, 1e-06
    %v145 = vadd.f32 %v141, 1e-06
    %v146 = vadd.f32 %v142, 1e-06
    %v147 = vadd.f32 %v143, 1e-06
    %v148 = vld [vmem:[#allocation8] sm:$0xff]
    %v149 = vld [vmem:[#allocation8 + $0x8] sm:$0xff]
    %v150 = vld [vmem:[#allocation8 + $0x10] sm:$0xff]
    %v151 = vld [vmem:[#allocation8 + $0x18] sm:$0xff]
    %v152 = vmul.f32 %v144, %v104
    %v153 = vmul.f32 %v145, %v105
    %v154 = vmul.f32 %v146, %v106
    %v155 = vmul.f32 %v147, %v107
    %v156 = vadd.f32 %v148, %v152
    %v157 = vadd.f32 %v149, %v153
    %v158 = vadd.f32 %v150, %v154
    %v159 = vadd.f32 %v151, %v155
    %v160 = vld [vmem:[#allocation2] sm:$0xff]
    %v161 = vld [vmem:[#allocation5] sm:$0xff]
    %vm162 = vcmask 261120
    %v164 = vsel %vm162, %v161, 0
    %166 = vmatpush.msra.mxu0 0.0
    %167 = vmatpush.msra.mxu0 0.0
    %168 = vmatpush.msra.mxu0 0.0
    %169 = vmatpush.msra.mxu0 0.0
    %170 = vmatpush.msra.mxu0 0.0
    %171 = vmatpush.msra.mxu0 0.0
    %172 = vmatpush.msra.mxu0 0.0
    %173 = vmatpush.msra.mxu0 0.0
    %174 = vmatpush.msra.mxu0 0.0
    %175 = vmatpush.msra.mxu0 0.0
    %176 = vmatpush.msra.mxu0 0.0
    %177 = vmatpush.msra.mxu0 0.0
    %178 = vmatpush.msra.mxu0 %v159
    %179 = vmatpush.msra.mxu0 %v158
    %180 = vmatpush.msra.mxu0 %v157
    %181 = vmatpush.msra.mxu0 %v156
    %182 = vmatmul.f32.gmra.mxu0 %v164
    %v183 = vpop.f32.mrf.mxu0
    %v184 = vadd.f32 0.0, %v183
    %185 = vdwg.mxu0
    %v186 = vadd.f32 %v160, %v184
    %187 = vst.msk [vmem:[#allocation2] sm:$0xff] %vm162, %v186
    %v188 = vld [vmem:[#allocation3] sm:$0x1]
    %v189 = vlog2.pop %v144
    %v190 = vmul.f32 %v189, 0.6931472
    %v191 = vlog2.pop %v145
    %v192 = vmul.f32 %v191, 0.6931472
    %v193 = vlog2.pop %v146
    %v194 = vmul.f32 %v193, 0.6931472
    %v195 = vlog2.pop %v147
    %v196 = vmul.f32 %v195, 0.6931472
    %v197 = vsel %vm162, %v190, 0.0
    %198 = vadd.xlane.f32.xlu0 %v197
    %v199 = vpop.xlane.xlu0 %198
    %v200 = vsel %vm162, %v192, 0.0
    %201 = vadd.xlane.f32.xlu0 %v200
    %v202 = vpop.xlane.xlu0 %201
    %v203 = vsel %vm162, %v194, 0.0
    %204 = vadd.xlane.f32.xlu0 %v203
    %v205 = vpop.xlane.xlu0 %204
    %v206 = vsel %vm162, %v196, 0.0
    %207 = vadd.xlane.f32.xlu0 %v206
    %v208 = vpop.xlane.xlu0 %207
    %v209 = vadd.f32 %v199, %v202
    %v210 = vadd.f32 %v209, %v205
    %v211 = vadd.f32 %v210, %v208
    %v212 = vrot.slane %v211, 4
    %v213 = vadd.f32 %v211, %v212
    %v214 = vrot.slane %v213, 2
    %v215 = vadd.f32 %v213, %v214
    %v216 = vrot.slane %v215, 1
    %v217 = vadd.f32 %v215, %v216
    %v218 = vsub.f32 0.0, %v217
    %v219 = vmul.f32 %v104, %v104
    %v220 = vmul.f32 %v105, %v105
    %v221 = vmul.f32 %v106, %v106
    %v222 = vmul.f32 %v107, %v107
    %v223 = vsel %vm162, %v219, 0.0
    %224 = vadd.xlane.f32.xlu0 %v223
    %v225 = vpop.xlane.xlu0 %224
    %v226 = vsel %vm162, %v220, 0.0
    %227 = vadd.xlane.f32.xlu0 %v226
    %v228 = vpop.xlane.xlu0 %227
    %v229 = vsel %vm162, %v221, 0.0
    %230 = vadd.xlane.f32.xlu0 %v229
    %v231 = vpop.xlane.xlu0 %230
    %v232 = vsel %vm162, %v222, 0.0
    %233 = vadd.xlane.f32.xlu0 %v232
    %v234 = vpop.xlane.xlu0 %233
    %v235 = vadd.f32 %v225, %v228
    %v236 = vadd.f32 %v235, %v231
    %v237 = vadd.f32 %v236, %v234
    %v238 = vrot.slane %v237, 4
    %v239 = vadd.f32 %v237, %v238
    %v240 = vrot.slane %v239, 2
    %v241 = vadd.f32 %v239, %v240
    %v242 = vrot.slane %v241, 1
    %v243 = vadd.f32 %v241, %v242
    %v244 = vmul.f32 %v243, 0.5
    %v245 = vsub.f32 %v218, %v244
    %v246 = vadd.f32 %v188, %v245
    %vm247 = vcmask 0
    %248 = vst.msk [vmem:[#allocation3] sm:$0x1] %vm247, %v246
    %v249 = vld [vmem:[#allocation4] sm:$0x1]
    %v250 = vmul.f32 %v156, %v156
    %v251 = vmul.f32 %v157, %v157
    %v252 = vmul.f32 %v158, %v158
    %v253 = vmul.f32 %v159, %v159
    %v254 = vsel %vm162, %v250, 0.0
    %255 = vadd.xlane.f32.xlu0 %v254
    %v256 = vpop.xlane.xlu0 %255
    %v257 = vsel %vm162, %v251, 0.0
    %258 = vadd.xlane.f32.xlu0 %v257
    %v259 = vpop.xlane.xlu0 %258
    %v260 = vsel %vm162, %v252, 0.0
    %261 = vadd.xlane.f32.xlu0 %v260
    %v262 = vpop.xlane.xlu0 %261
    %v263 = vsel %vm162, %v253, 0.0
    %264 = vadd.xlane.f32.xlu0 %v263
    %v265 = vpop.xlane.xlu0 %264
    %v266 = vadd.f32 %v256, %v259
    %v267 = vadd.f32 %v266, %v262
    %v268 = vadd.f32 %v267, %v265
    %v269 = vrot.slane %v268, 4
    %v270 = vadd.f32 %v268, %v269
    %v271 = vrot.slane %v270, 2
    %v272 = vadd.f32 %v270, %v271
    %v273 = vrot.slane %v272, 1
    %v274 = vadd.f32 %v272, %v273
    %v275 = vadd.f32 %v249, %v274
    %276 = vst.msk [vmem:[#allocation4] sm:$0x1] %vm247, %v275
    // Predicated region
    $region50: #{bayes_linear_forward.1} parent=1 // pred_check
      %p277 = pneg %p91
    $region51: #{bayes_linear_forward.1} parent=1 // pred_check_branch
      %279 = sbr.rel (%p277) target = $region53
    $region52: #{bayes_linear_forward.1} parent=1 // pred_region
      %v280 = vld [vmem:[%s6] sm:$0x1]
      %v281 = vunpack.c.l.bf16 %v280
      %v282 = vld [vmem:[%s5] sm:$0x1]
      %vm283 = vcmp.gt.f32.partialorder %v282, 20.0
      %v284 = vmin.f32 %v282, 20.0
      %v285 = vmul.f32 %v284, 1.442695
      %v286 = vpow.pop %v285
      %v287 = vadd.f32 %v286, 1.0
      %v288 = vlog2.pop %v287
      %v289 = vmul.f32 %v288, 0.6931472
      %v290 = vsel %vm283, %v282, %v289
      %v291 = vadd.f32 %v290, 1e-06
      %v292 = vld [vmem:[%s4] sm:$0x1]
      %v293 = vmul.f32 %v291, %v281
      %v294 = vadd.f32 %v292, %v293
      %v295 = vld [vmem:[#allocation2] sm:$0xff]
      %v297 = vperm.slane %v294, 0
      %v299 = vadd.f32 %v295, %v297
      %300 = vst.msk [vmem:[#allocation13] sm:$0xff] %vm162, %v299
      %v301 = vld [vmem:[#allocation3] sm:$0x1]
      %v302 = vlog2.pop %v291
      %v303 = vmul.f32 %v302, 0.6931472
      %vm304 = vcmask 253952
      %v305 = vsel %vm304, %v303, 0.0
      %306 = vadd.xlane.f32.xlu0 %v305
      %v307 = vpop.xlane.xlu0 %306
      %v308 = vadd.f32 %v307, 0.0
      %v309 = vsub.f32 %v301, %v308
      %v310 = vmul.f32 %v281, %v281
      %v311 = vsel %vm304, %v310, 0.0
      %312 = vadd.xlane.f32.xlu0 %v311
      %v313 = vpop.xlane.xlu0 %312
      %v314 = vadd.f32 %v313, 0.0
      %v315 = vmul.f32 %v314, 0.5
      %v316 = vsub.f32 %v309, %v315
      %v317 = vld [vmem:[#allocation4] sm:$0x1]
      %v318 = vmul.f32 %v294, %v294
      %v319 = vsel %vm304, %v318, 0.0
      %320 = vadd.xlane.f32.xlu0 %v319
      %v321 = vpop.xlane.xlu0 %320
      %v322 = vadd.f32 %v321, 0.0
      %v323 = vadd.f32 %v317, %v322
      %v325 = vperm.slane %v316, 0
      %326 = vset.pattern.permute.xlu0 0
      %327 = vperm.xlu0 %326, %v325
      %v328 = vpop.permute.xlu0 %327
      %330 = vst [vmem:[%s8] sm:$0xff] %v328
      %v332 = vperm.slane %v323, 0
      %333 = vset.pattern.permute.xlu0 0
      %334 = vperm.xlu0 %333, %v332
      %v335 = vpop.permute.xlu0 %334
      %337 = vst [vmem:[%s9] sm:$0xff] %v335
    $region53: #{bayes_linear_forward.1} parent=1 // pred_fallthru
      _
    // Predicated region
    $region54: #{bayes_linear_forward.1} parent=1 // pred_check
      _
    $region55: #{bayes_linear_forward.1} parent=1 // pred_check_branch
      %339 = sbr.rel (0) target = $region57
    $region56: #{bayes_linear_forward.1} parent=1 // pred_region
      %341 = vsyncadd [#allocation7], 0
      %s343 = sshll.u32 [#allocation13], 4
      %s344 = int_to_ptr.vmem [resolvable:$true] %s343
      %s345 = sshll.u32 %s7, 4
      %s346 = int_to_ptr.hbm [resolvable:$true] %s345
      %348 = dma.vmem_to_hbm [thread:$0]  %s344, 128, %s346, [#allocation7]
    $region57: #{bayes_linear_forward.1} parent=1 // pred_fallthru
      _
    // Predicated region
    $region58: #{bayes_linear_forward.1} parent=1 // pred_check
      _
    $region59: #{bayes_linear_forward.1} parent=1 // pred_check_branch
      %350 = sbr.rel (0) target = $region61
    $region60: #{bayes_linear_forward.1} parent=1 // pred_region
      _
    $region61: #{bayes_linear_forward.1} parent=1 // pred_fallthru
      _
    // Predicated region
    $region62: #{bayes_linear_forward.1} parent=1 // pred_check
      _
    $region63: #{bayes_linear_forward.1} parent=1 // pred_check_branch
      %352 = sbr.rel (0) target = $region65
    $region64: #{bayes_linear_forward.1} parent=1 // pred_region
      _
    $region65: #{bayes_linear_forward.1} parent=1 // pred_fallthru
      _
    // Predicated region
    $region66: #{bayes_linear_forward.1} parent=1 // pred_check
      _
    $region67: #{bayes_linear_forward.1} parent=1 // pred_check_branch
      %354 = sbr.rel (0) target = $region69
    $region68: #{bayes_linear_forward.1} parent=1 // pred_region
      %356 = dma.done [#allocation7], 128
    $region69: #{bayes_linear_forward.1} parent=1 // pred_fallthru
      _
    // Predicated region
    $region70: #{bayes_linear_forward.1} parent=1 // pred_check
      _
    $region71: #{bayes_linear_forward.1} parent=1 // pred_check_branch
      %358 = sbr.rel (0) target = $region73
    $region72: #{bayes_linear_forward.1} parent=1 // pred_region
      _
    $region73: #{bayes_linear_forward.1} parent=1 // pred_fallthru
      _
    // Predicated region
    $region74: #{bayes_linear_forward.1} parent=1 // pred_check
      _
    $region75: #{bayes_linear_forward.1} parent=1 // pred_check_branch
      %360 = sbr.rel (0) target = $region77
    $region76: #{bayes_linear_forward.1} parent=1 // pred_region
      _
    $region77: #{bayes_linear_forward.1} parent=1 // pred_fallthru
      _
    %361 = vsyncpa [#allocation6], 1
    %362 = vsyncpa [#allocation9], 1
    %363 = vsyncpa [#allocation12], 1
    %364 = vsyncpa [#allocation7], 1

</llo_original>
